<compile_context>
chip_gen: v5e
topology: v5e:2x2
jax: 0.10.0
libtpu: 0.0.40
codegen_flags: <defaults>
</compile_context>

<pallas_src>
import functools

import jax
import jax.numpy as jnp
from jax.experimental import pallas as pl
from jax.experimental.pallas import tpu as pltpu


_BF16 = jnp.bfloat16
_SUBLANE = 16                      # bf16 row blocks -> sublane multiple of 16


# ---------------------------------------------------------------------------
# Kernel
# ---------------------------------------------------------------------------
def _gate_kernel(ctx_ref, w_ref, prm_ref, noise_ref, rep_ref, out_ref,
                 *, tau, hard, eps, h):
    # --- fused Linear(D -> 2H): one bf16 x bf16 MXU matmul, f32 accumulation
    x = jnp.dot(ctx_ref[...], w_ref[...], preferred_element_type=jnp.float32)
    x = x + prm_ref[0:1, :]                                  # bias row (1, 2H)

    # --- LayerNorm over the full 2H feature axis (f32, LayerNorm([2H])) ---
    mean = jnp.mean(x, axis=-1, keepdims=True)
    var = jnp.mean((x - mean) ** 2, axis=-1, keepdims=True)
    x = (x - mean) * jax.lax.rsqrt(var + eps)
    x = x * prm_ref[1:2, :] + prm_ref[2:3, :]                # LN scale / shift rows

    # --- ReLU + gumbel perturbation + temperature ---
    x = jnp.maximum(x, 0.0)
    logits = (x + noise_ref[...].astype(jnp.float32)) * (1.0 / tau)
    # TODO(synk): for H not a multiple of 128 this class split costs lane
    # rotates; vreg-aligned class-column padding (perf-review item) not done.
    la = logits[:, :h]                                       # class-0 logits
    lb = logits[:, h:]                                       # class-1 logits

    if hard:
        # Straight-through argmax, forward value only (ties -> class 0, as torch).
        # TODO(synk): hard=True backward (straight-through estimator) needs a
        # custom_vjp; only the forward value is implemented here.
        pm = jnp.where(la >= lb, 1.0, 0.0)
    else:
        # softmax over exactly 2 classes == sigmoid of the logit difference.
        pm = 1.0 / (1.0 + jnp.exp(lb - la))

    rep_p = rep_ref[...] * pm
    # Single lane-dense output slab [pm | rep_p]; gm / rep_g are recomputed by
    # the wrapper (gm = 1 - pm, rep_g = rep - rep_p) -> half the write bytes.
    out_ref[:, :h] = pm
    out_ref[:, h:] = rep_p


# ---------------------------------------------------------------------------
# Tiling / VMEM helpers
# ---------------------------------------------------------------------------
def _vmem_budget_bytes():
    """Generation-aware tile-sizing budget (v7x: 64 MiB/TC; v5e/v6e: 128 MiB)."""
    cap = 128 << 20
    try:
        cap = int(pltpu.get_tpu_info().vmem_capacity_bytes)
    except Exception:
        pass                         # fall back to the conservative 128 MiB guess
    return min(26 << 20, max(12 << 20, (2 * cap) // 5))


def _tile_footprint(D, H, rows):
    """Double-buffered VMEM bytes for a `rows`-row batch tile."""
    # per-row: ctx bf16 (2D) + noise bf16 (4H) + rep f32 (4H) + out slab f32 (8H)
    per_row = 2 * (2 * D + 4 * H + 4 * H + 8 * H)
    # resident: fused weight bf16 (assume x2 in case single-buffering is not
    # honored) + packed params f32 (sublane-padded), both constant-index blocks.
    fixed = 2 * (2 * D * 2 * H) + 2 * (8 * 2 * H * 4)
    return fixed + per_row * rows, per_row, fixed


def _choose_batch_tile(B, D, H, budget_bytes):
    _, per_row, fixed = _tile_footprint(D, H, 0)
    rows = max((budget_bytes - fixed) // per_row, _SUBLANE)
    if rows >= B:
        # Prefer >=2 grid steps when expressible with sublane-aligned tiles:
        # lets v7x megacore shard the "parallel" batch axis and overlaps
        # input/output DMA across steps on single-TC chips.
        half = -(-((B + 1) // 2) // _SUBLANE) * _SUBLANE
        if half < B:
            return half
        return B                     # full-extent block is always legal
    return max(_SUBLANE, (rows // _SUBLANE) * _SUBLANE)


# ---------------------------------------------------------------------------
# Wrapper
# ---------------------------------------------------------------------------
def prepare_gate_params(fc_w, fc_b, ln_w, ln_b):
    """One-time parameter prep (hoisted out of the per-call path).

    fc_w: (2H, D) nn.Linear weight; fc_b/ln_w/ln_b: (2H,).
    Returns pre-transposed fused bf16 weight (D, 2H) and packed f32 (3, 2H)
    rows [bias; ln_weight; ln_bias].
    """
    w_t = jnp.transpose(fc_w).astype(_BF16)                             # (D, 2H)
    packed = jnp.stack([fc_b, ln_w, ln_b], axis=0).astype(jnp.float32)  # (3, 2H)
    return {"w_t": w_t, "packed": packed}


def gate_forward(rep, context, prepared, gumbel_noise, *, tau=1.0, hard=False):
    """Returns (rep_p, rep_g, pm, gm).  rep: (B, H), context: (B, D),
    gumbel_noise: (B, 2, H) samples for F.gumbel_softmax."""
    B, H = rep.shape
    D = context.shape[1]
    w_t = prepared["w_t"]                                   # (D, 2H) bf16
    packed = prepared["packed"]                             # (3, 2H) f32

    ctx = context.astype(_BF16)                             # bf16 DMA + MXU input
    noise2h = gumbel_noise.reshape(B, 2 * H).astype(_BF16)  # [class0 | class1]
    rep32 = rep.astype(jnp.float32)                         # keep rep*pm exact

    budget = _vmem_budget_bytes()
    TB = _choose_batch_tile(B, D, H, budget)
    footprint, _, _ = _tile_footprint(D, H, TB)
    vmem_limit = int(max(budget, footprint + (4 << 20)))
    grid = (pl.cdiv(B, TB),)

    kernel = functools.partial(_gate_kernel, tau=float(tau), hard=bool(hard),
                               eps=1e-5, h=H)

    io_bytes = (2 * B * D + 2 * D * 2 * H + 4 * 3 * 2 * H
                + 2 * B * 2 * H + 4 * B * H + 4 * B * 2 * H)
    cost = pl.CostEstimate(
        flops=2 * B * D * 2 * H + 20 * B * H,
        transcendentals=0 if hard else B * H,
        bytes_accessed=io_bytes,
    )

    def call(single_buffer_consts):
        row_ctx = pl.BlockSpec((TB, D), lambda i: (i, 0))
        row_2h = pl.BlockSpec((TB, 2 * H), lambda i: (i, 0))
        row_h = pl.BlockSpec((TB, H), lambda i: (i, 0))
        if single_buffer_consts:
            # Constant-index resident blocks: request a single VMEM copy
            # instead of the default double buffer (recovers 4*D*H bytes).
            const_w = pl.BlockSpec((D, 2 * H), lambda i: (0, 0),
                                   pipeline_mode=pl.Buffered(1))
            const_p = pl.BlockSpec((3, 2 * H), lambda i: (0, 0),
                                   pipeline_mode=pl.Buffered(1))
        else:
            const_w = pl.BlockSpec((D, 2 * H), lambda i: (0, 0))
            const_p = pl.BlockSpec((3, 2 * H), lambda i: (0, 0))
        return pl.pallas_call(
            kernel,
            out_shape=jax.ShapeDtypeStruct((B, 2 * H), jnp.float32),
            grid=grid,
            in_specs=[row_ctx, const_w, const_p, row_2h, row_h],
            out_specs=row_2h,
            compiler_params=pltpu.CompilerParams(
                dimension_semantics=("parallel",),
                vmem_limit_bytes=vmem_limit),
            cost_estimate=cost,
        )(ctx, w_t, packed, noise2h, rep32)

    try:
        out = call(True)
    except Exception:
        # pipeline_mode=pl.Buffered(1) not honored on this build; retry without.
        out = call(False)

    pm = out[:, :H]
    rep_p = out[:, H:]
    gm = 1.0 - pm              # cheap trailing XLA ops, no kernel write traffic
    rep_g = rep32 - rep_p      # == rep * gm
    return rep_p, rep_g, pm, gm


class GatePallas:
    """Mimics Gate: stores the produced masks and dispatches on `flag`."""

    def __init__(self, params):
        self.prepared = prepare_gate_params(params["fc_w"], params["fc_b"],
                                            params["ln_w"], params["ln_b"])
        self.training = True
        self.pm, self.gm, self.pm_, self.gm_ = [], [], [], []

    def __call__(self, rep, tau=1.0, hard=False, context=None, noise=None, flag=0):
        rep_p, rep_g, pm, gm = gate_forward(rep, context, self.prepared, noise,
                                            tau=tau, hard=hard)
        # Store whole device arrays (no per-row list() -> no device->host sync
        # inside the training loop; original torch code extended row-by-row).
        if self.training:
            self.pm.append(pm)
            self.gm.append(gm)
        else:
            self.pm_.append(pm)
            self.gm_.append(gm)
        if flag == 0:
            return rep_p, rep_g
        elif flag == 1:
            return rep_p
        return rep_g


# ---------------------------------------------------------------------------
# Pure-JAX reference (same bf16 ingest policy as the kernel) + self-check
# ---------------------------------------------------------------------------
def _reference(rep, context, params, noise, tau=1.0, hard=False):
    w_t = jnp.transpose(params["fc_w"]).astype(_BF16)
    x = jnp.dot(context.astype(_BF16), w_t,
                preferred_element_type=jnp.float32) + params["fc_b"]
    mean = jnp.mean(x, axis=-1, keepdims=True)
    var = jnp.mean((x - mean) ** 2, axis=-1, keepdims=True)
    x = (x - mean) / jnp.sqrt(var + 1e-5) * params["ln_w"] + params["ln_b"]
    x = jnp.maximum(x, 0.0)
    B = x.shape[0]
    x = x.reshape(B, 2, -1)
    logits = (x + noise.astype(_BF16).astype(jnp.float32)) / tau
    soft = jax.nn.softmax(logits, axis=1)
    if hard:
        idx = jnp.argmax(logits, axis=1, keepdims=True)
        soft = (jnp.arange(2).reshape(1, 2, 1) == idx).astype(jnp.float32)
    pm, gm = soft[:, 0, :], soft[:, 1, :]
    return rep * pm, rep * gm, pm, gm


if __name__ == "__main__":
    key = jax.random.PRNGKey(0)
    B, D, H = 8, 32, 32   # batch, context dim (in_dim), feature dim (h_dim)

    k_w, k_b, k_rep, k_ctx, k_g = jax.random.split(key, 5)
    params = {
        "fc_w": 0.1 * jax.random.normal(k_w, (2 * H, D), jnp.float32),
        "fc_b": 0.01 * jax.random.normal(k_b, (2 * H,), jnp.float32),
        "ln_w": jnp.ones((2 * H,), jnp.float32),   # PyTorch LayerNorm defaults
        "ln_b": jnp.zeros((2 * H,), jnp.float32),
    }
    rep = jax.random.normal(k_rep, (B, H), jnp.float32)
    context = jax.random.normal(k_ctx, (B, D), jnp.float32)
    # Deterministic gumbel noise for the (B, 2, H) logits (F.gumbel_softmax samples).
    noise = jax.random.gumbel(k_g, (B, 2, H), jnp.float32)

    gate = GatePallas(params)

    # soft path
    rep_p, rep_g = gate(rep, tau=1.0, hard=False, context=context, noise=noise, flag=0)
    jax.block_until_ready((rep_p, rep_g))
    ref_p, ref_g, ref_pm, ref_gm = _reference(rep, context, params, noise,
                                              tau=1.0, hard=False)
    assert jnp.allclose(rep_p, ref_p, atol=1e-4, rtol=1e-4)
    assert jnp.allclose(rep_g, ref_g, atol=1e-4, rtol=1e-4)
    assert jnp.allclose(gate.pm[-1], ref_pm, atol=1e-4, rtol=1e-4)
    assert jnp.allclose(gate.gm[-1], ref_gm, atol=1e-4, rtol=1e-4)

    # hard path (forward value only) through both flag branches
    rep_ph = gate(rep, tau=0.5, hard=True, context=context, noise=noise, flag=1)
    rep_gh = gate(rep, tau=0.5, hard=True, context=context, noise=noise, flag=2)
    jax.block_until_ready((rep_ph, rep_gh))
    ref_ph, ref_gh, _, _ = _reference(rep, context, params, noise, tau=0.5, hard=True)
    assert jnp.allclose(rep_ph, ref_ph, atol=1e-4, rtol=1e-4)
    assert jnp.allclose(rep_gh, ref_gh, atol=1e-4, rtol=1e-4)

    print("KERNEL_OK")
</pallas_src>

<mosaic_0001>
module attributes {stable_mosaic.version = 11 : i64} {
  func.func @_gate_kernel(%arg0: i32, %arg1: memref<8x32xbf16, #tpu.memory_space<vmem>>, %arg2: memref<32x64xbf16, #tpu.memory_space<vmem>>, %arg3: memref<3x64xf32, #tpu.memory_space<vmem>>, %arg4: memref<8x64xbf16, #tpu.memory_space<vmem>>, %arg5: memref<8x32xf32, #tpu.memory_space<vmem>>, %arg6: memref<8x64xf32, #tpu.memory_space<vmem>>) attributes {dimension_semantics = [#tpu.dimension_semantics<parallel>], iteration_bounds = array<i64: 1>, scalar_prefetch = 0 : i64, scratch_operands = 0 : i64, tpu.core_type = #tpu.core_type<tc>, window_params = [{transform_indices = @transform_0, window_bounds = array<i64: 8, 32>}, {pipeline_mode = #tpu.pipeline_mode<synchronous>, transform_indices = @transform_1, window_bounds = array<i64: 32, 64>}, {pipeline_mode = #tpu.pipeline_mode<synchronous>, transform_indices = @transform_2, window_bounds = array<i64: 3, 64>}, {transform_indices = @transform_3, window_bounds = array<i64: 8, 64>}, {transform_indices = @transform_4, window_bounds = array<i64: 8, 32>}, {transform_indices = @transform_5, window_bounds = array<i64: 8, 64>}]} {
    %c0 = arith.constant 0 : index
    %c0_0 = arith.constant 0 : index
    %0 = vector.load %arg1[%c0, %c0_0] : memref<8x32xbf16, #tpu.memory_space<vmem>>, vector<8x32xbf16>
    %c0_1 = arith.constant 0 : index
    %c0_2 = arith.constant 0 : index
    %1 = vector.load %arg2[%c0_1, %c0_2] : memref<32x64xbf16, #tpu.memory_space<vmem>>, vector<32x64xbf16>
    %cst = arith.constant dense<0.000000e+00> : vector<8x64xf32>
    %2 = tpu.matmul %0, %1, %cst {dimension_numbers = #tpu.dot_dimension_numbers<[1], [0], [0], [1], [0, 0, 1, 1], [], []>} : vector<8x32xbf16>, vector<32x64xbf16>, vector<8x64xf32> -> vector<8x64xf32>
    %c0_3 = arith.constant 0 : index
    %c0_4 = arith.constant 0 : index
    %3 = vector.load %arg3[%c0_3, %c0_4] : memref<3x64xf32, #tpu.memory_space<vmem>>, vector<1x64xf32>
    %4 = vector.broadcast %3 : vector<1x64xf32> to vector<8x64xf32>
    %5 = arith.addf %2, %4 : vector<8x64xf32>
    %cst_5 = arith.constant dense<0.000000e+00> : vector<8xf32>
    %6 = vector.multi_reduction <add>, %5, %cst_5 [1] : vector<8x64xf32> to vector<8xf32>
    %7 = vector.shape_cast %6 : vector<8xf32> to vector<8x1xf32>
    %cst_6 = arith.constant 6.400000e+01 : f32
    %8 = vector.broadcast %cst_6 : f32 to vector<8x1xf32>
    %9 = arith.divf %7, %8 : vector<8x1xf32>
    %10 = vector.broadcast %9 : vector<8x1xf32> to vector<8x64xf32>
    %11 = arith.subf %5, %10 : vector<8x64xf32>
    %12 = arith.mulf %11, %11 : vector<8x64xf32>
    %cst_7 = arith.constant dense<0.000000e+00> : vector<8xf32>
    %13 = vector.multi_reduction <add>, %12, %cst_7 [1] : vector<8x64xf32> to vector<8xf32>
    %14 = vector.shape_cast %13 : vector<8xf32> to vector<8x1xf32>
    %cst_8 = arith.constant 6.400000e+01 : f32
    %15 = vector.broadcast %cst_8 : f32 to vector<8x1xf32>
    %16 = arith.divf %14, %15 : vector<8x1xf32>
    %17 = vector.broadcast %9 : vector<8x1xf32> to vector<8x64xf32>
    %18 = arith.subf %5, %17 : vector<8x64xf32>
    %cst_9 = arith.constant 9.99999974E-6 : f32
    %19 = vector.broadcast %cst_9 : f32 to vector<8x1xf32>
    %20 = arith.addf %16, %19 : vector<8x1xf32>
    %21 = math.rsqrt %20 : vector<8x1xf32>
    %22 = vector.broadcast %21 : vector<8x1xf32> to vector<8x64xf32>
    %23 = arith.mulf %18, %22 : vector<8x64xf32>
    %c1 = arith.constant 1 : index
    %c0_10 = arith.constant 0 : index
    %24 = vector.load %arg3[%c1, %c0_10] : memref<3x64xf32, #tpu.memory_space<vmem>>, vector<1x64xf32>
    %25 = vector.broadcast %24 : vector<1x64xf32> to vector<8x64xf32>
    %26 = arith.mulf %23, %25 : vector<8x64xf32>
    %c2 = arith.constant 2 : index
    %c0_11 = arith.constant 0 : index
    %27 = vector.load %arg3[%c2, %c0_11] : memref<3x64xf32, #tpu.memory_space<vmem>>, vector<1x64xf32>
    %28 = vector.broadcast %27 : vector<1x64xf32> to vector<8x64xf32>
    %29 = arith.addf %26, %28 : vector<8x64xf32>
    %cst_12 = arith.constant 0.000000e+00 : f32
    %30 = vector.broadcast %cst_12 : f32 to vector<8x64xf32>
    %31 = arith.maximumf %29, %30 : vector<8x64xf32>
    %c0_13 = arith.constant 0 : index
    %c0_14 = arith.constant 0 : index
    %32 = vector.load %arg4[%c0_13, %c0_14] : memref<8x64xbf16, #tpu.memory_space<vmem>>, vector<8x64xbf16>
    %33 = arith.extf %32 : vector<8x64xbf16> to vector<8x64xf32>
    %34 = arith.addf %31, %33 : vector<8x64xf32>
    %cst_15 = arith.constant 1.000000e+00 : f32
    %35 = vector.broadcast %cst_15 : f32 to vector<8x64xf32>
    %36 = arith.mulf %34, %35 : vector<8x64xf32>
    %37 = vector.extract_strided_slice %36 {offsets = [0, 0], sizes = [8, 32], strides = [1, 1]} : vector<8x64xf32> to vector<8x32xf32>
    %38 = vector.extract_strided_slice %36 {offsets = [0, 32], sizes = [8, 32], strides = [1, 1]} : vector<8x64xf32> to vector<8x32xf32>
    %39 = arith.subf %38, %37 : vector<8x32xf32>
    %40 = math.exp %39 : vector<8x32xf32>
    %cst_16 = arith.constant 1.000000e+00 : f32
    %41 = vector.broadcast %cst_16 : f32 to vector<8x32xf32>
    %42 = arith.addf %41, %40 : vector<8x32xf32>
    %cst_17 = arith.constant 1.000000e+00 : f32
    %43 = vector.broadcast %cst_17 : f32 to vector<8x32xf32>
    %44 = arith.divf %43, %42 : vector<8x32xf32>
    %c0_18 = arith.constant 0 : index
    %c0_19 = arith.constant 0 : index
    %45 = vector.load %arg5[%c0_18, %c0_19] : memref<8x32xf32, #tpu.memory_space<vmem>>, vector<8x32xf32>
    %46 = arith.mulf %45, %44 : vector<8x32xf32>
    %c0_20 = arith.constant 0 : index
    %c0_21 = arith.constant 0 : index
    %47 = vector.load %arg6[%c0_20, %c0_21] : memref<8x64xf32, #tpu.memory_space<vmem>>, vector<8x32xf32>
    tpu.vector_store %arg6[%c0_20, %c0_21], %44 {strides = array<i32>} : memref<8x64xf32, #tpu.memory_space<vmem>>, vector<8x32xf32>,
    %c0_22 = arith.constant 0 : index
    %c32 = arith.constant 32 : index
    %48 = vector.load %arg6[%c0_22, %c32] : memref<8x64xf32, #tpu.memory_space<vmem>>, vector<8x32xf32>
    tpu.vector_store %arg6[%c0_22, %c32], %46 {strides = array<i32>} : memref<8x64xf32, #tpu.memory_space<vmem>>, vector<8x32xf32>,
    return
  }
  func.func @transform_0(%arg0: i32) -> (i32, i32) {
    %c0_i32 = arith.constant 0 : i32
    %c0_i32_0 = arith.constant 0 : i32
    return %arg0, %c0_i32 : i32, i32
  }
  func.func @transform_1(%arg0: i32) -> (i32, i32) {
    %c0_i32 = arith.constant 0 : i32
    %c0_i32_0 = arith.constant 0 : i32
    %c0_i32_1 = arith.constant 0 : i32
    return %c0_i32, %c0_i32_0 : i32, i32
  }
  func.func @transform_2(%arg0: i32) -> (i32, i32) {
    %c0_i32 = arith.constant 0 : i32
    %c0_i32_0 = arith.constant 0 : i32
    %c0_i32_1 = arith.constant 0 : i32
    return %c0_i32, %c0_i32_0 : i32, i32
  }
  func.func @transform_3(%arg0: i32) -> (i32, i32) {
    %c0_i32 = arith.constant 0 : i32
    %c0_i32_0 = arith.constant 0 : i32
    return %arg0, %c0_i32 : i32, i32
  }
  func.func @transform_4(%arg0: i32) -> (i32, i32) {
    %c0_i32 = arith.constant 0 : i32
    %c0_i32_0 = arith.constant 0 : i32
    return %arg0, %c0_i32 : i32, i32
  }
  func.func @transform_5(%arg0: i32) -> (i32, i32) {
    %c0_i32 = arith.constant 0 : i32
    %c0_i32_0 = arith.constant 0 : i32
    return %arg0, %c0_i32 : i32, i32
  }
}

module attributes {stable_mosaic.version = 11 : i64} {
  func.func @_gate_kernel(%arg0: i32, %arg1: memref<8x32xbf16, #tpu.memory_space<vmem>>, %arg2: memref<32x64xbf16, #tpu.memory_space<vmem>>, %arg3: memref<3x64xf32, #tpu.memory_space<vmem>>, %arg4: memref<8x64xbf16, #tpu.memory_space<vmem>>, %arg5: memref<8x32xf32, #tpu.memory_space<vmem>>, %arg6: memref<8x64xf32, #tpu.memory_space<vmem>>) attributes {dimension_semantics = [#tpu.dimension_semantics<parallel>], iteration_bounds = array<i64: 1>, scalar_prefetch = 0 : i64, scratch_operands = 0 : i64, tpu.core_type = #tpu.core_type<tc>, window_params = [{transform_indices = @transform_0, window_bounds = array<i64: 8, 32>}, {pipeline_mode = #tpu.pipeline_mode<synchronous>, transform_indices = @transform_1, window_bounds = array<i64: 32, 64>}, {pipeline_mode = #tpu.pipeline_mode<synchronous>, transform_indices = @transform_2, window_bounds = array<i64: 3, 64>}, {transform_indices = @transform_3, window_bounds = array<i64: 8, 64>}, {transform_indices = @transform_4, window_bounds = array<i64: 8, 32>}, {transform_indices = @transform_5, window_bounds = array<i64: 8, 64>}]} {
    %c0 = arith.constant 0 : index
    %c0_0 = arith.constant 0 : index
    %0 = vector.load %arg1[%c0, %c0_0] : memref<8x32xbf16, #tpu.memory_space<vmem>>, vector<8x32xbf16>
    %c0_1 = arith.constant 0 : index
    %c0_2 = arith.constant 0 : index
    %1 = vector.load %arg2[%c0_1, %c0_2] : memref<32x64xbf16, #tpu.memory_space<vmem>>, vector<32x64xbf16>
    %cst = arith.constant dense<0.000000e+00> : vector<8x64xf32>
    %2 = tpu.matmul %0, %1, %cst {dimension_numbers = #tpu.dot_dimension_numbers<[1], [0], [0], [1], [0, 0, 1, 1], [], []>} : vector<8x32xbf16>, vector<32x64xbf16>, vector<8x64xf32> -> vector<8x64xf32>
    %c0_3 = arith.constant 0 : index
    %c0_4 = arith.constant 0 : index
    %3 = vector.load %arg3[%c0_3, %c0_4] : memref<3x64xf32, #tpu.memory_space<vmem>>, vector<1x64xf32>
    %4 = vector.broadcast %3 : vector<1x64xf32> to vector<8x64xf32>
    %5 = arith.addf %2, %4 : vector<8x64xf32>
    %cst_5 = arith.constant dense<0.000000e+00> : vector<8xf32>
    %6 = vector.multi_reduction <add>, %5, %cst_5 [1] : vector<8x64xf32> to vector<8xf32>
    %7 = vector.shape_cast %6 : vector<8xf32> to vector<8x1xf32>
    %cst_6 = arith.constant 6.400000e+01 : f32
    %8 = vector.broadcast %cst_6 : f32 to vector<8x1xf32>
    %9 = arith.divf %7, %8 : vector<8x1xf32>
    %10 = vector.broadcast %9 : vector<8x1xf32> to vector<8x64xf32>
    %11 = arith.subf %5, %10 : vector<8x64xf32>
    %12 = arith.mulf %11, %11 : vector<8x64xf32>
    %cst_7 = arith.constant dense<0.000000e+00> : vector<8xf32>
    %13 = vector.multi_reduction <add>, %12, %cst_7 [1] : vector<8x64xf32> to vector<8xf32>
    %14 = vector.shape_cast %13 : vector<8xf32> to vector<8x1xf32>
    %cst_8 = arith.constant 6.400000e+01 : f32
    %15 = vector.broadcast %cst_8 : f32 to vector<8x1xf32>
    %16 = arith.divf %14, %15 : vector<8x1xf32>
    %17 = vector.broadcast %9 : vector<8x1xf32> to vector<8x64xf32>
    %18 = arith.subf %5, %17 : vector<8x64xf32>
    %cst_9 = arith.constant 9.99999974E-6 : f32
    %19 = vector.broadcast %cst_9 : f32 to vector<8x1xf32>
    %20 = arith.addf %16, %19 : vector<8x1xf32>
    %21 = math.rsqrt %20 : vector<8x1xf32>
    %22 = vector.broadcast %21 : vector<8x1xf32> to vector<8x64xf32>
    %23 = arith.mulf %18, %22 : vector<8x64xf32>
    %c1 = arith.constant 1 : index
    %c0_10 = arith.constant 0 : index
    %24 = vector.load %arg3[%c1, %c0_10] : memref<3x64xf32, #tpu.memory_space<vmem>>, vector<1x64xf32>
    %25 = vector.broadcast %24 : vector<1x64xf32> to vector<8x64xf32>
    %26 = arith.mulf %23, %25 : vector<8x64xf32>
    %c2 = arith.constant 2 : index
    %c0_11 = arith.constant 0 : index
    %27 = vector.load %arg3[%c2, %c0_11] : memref<3x64xf32, #tpu.memory_space<vmem>>, vector<1x64xf32>
    %28 = vector.broadcast %27 : vector<1x64xf32> to vector<8x64xf32>
    %29 = arith.addf %26, %28 : vector<8x64xf32>
    %cst_12 = arith.constant 0.000000e+00 : f32
    %30 = vector.broadcast %cst_12 : f32 to vector<8x64xf32>
    %31 = arith.maximumf %29, %30 : vector<8x64xf32>
    %c0_13 = arith.constant 0 : index
    %c0_14 = arith.constant 0 : index
    %32 = vector.load %arg4[%c0_13, %c0_14] : memref<8x64xbf16, #tpu.memory_space<vmem>>, vector<8x64xbf16>
    %33 = arith.extf %32 : vector<8x64xbf16> to vector<8x64xf32>
    %34 = arith.addf %31, %33 : vector<8x64xf32>
    %cst_15 = arith.constant 1.000000e+00 : f32
    %35 = vector.broadcast %cst_15 : f32 to vector<8x64xf32>
    %36 = arith.mulf %34, %35 : vector<8x64xf32>
    %37 = vector.extract_strided_slice %36 {offsets = [0, 0], sizes = [8, 32], strides = [1, 1]} : vector<8x64xf32> to vector<8x32xf32>
    %38 = vector.extract_strided_slice %36 {offsets = [0, 32], sizes = [8, 32], strides = [1, 1]} : vector<8x64xf32> to vector<8x32xf32>
    %39 = arith.subf %38, %37 : vector<8x32xf32>
    %40 = math.exp %39 : vector<8x32xf32>
    %cst_16 = arith.constant 1.000000e+00 : f32
    %41 = vector.broadcast %cst_16 : f32 to vector<8x32xf32>
    %42 = arith.addf %41, %40 : vector<8x32xf32>
    %cst_17 = arith.constant 1.000000e+00 : f32
    %43 = vector.broadcast %cst_17 : f32 to vector<8x32xf32>
    %44 = arith.divf %43, %42 : vector<8x32xf32>
    %c0_18 = arith.constant 0 : index
    %c0_19 = arith.constant 0 : index
    %45 = vector.load %arg5[%c0_18, %c0_19] : memref<8x32xf32, #tpu.memory_space<vmem>>, vector<8x32xf32>
    %46 = arith.mulf %45, %44 : vector<8x32xf32>
    %c0_20 = arith.constant 0 : index
    %c0_21 = arith.constant 0 : index
    %47 = vector.load %arg6[%c0_20, %c0_21] : memref<8x64xf32, #tpu.memory_space<vmem>>, vector<8x32xf32>
    tpu.vector_store %arg6[%c0_20, %c0_21], %44 {strides = array<i32>} : memref<8x64xf32, #tpu.memory_space<vmem>>, vector<8x32xf32>,
    %c0_22 = arith.constant 0 : index
    %c32 = arith.constant 32 : index
    %48 = vector.load %arg6[%c0_22, %c32] : memref<8x64xf32, #tpu.memory_space<vmem>>, vector<8x32xf32>
    tpu.vector_store %arg6[%c0_22, %c32], %46 {strides = array<i32>} : memref<8x64xf32, #tpu.memory_space<vmem>>, vector<8x32xf32>,
    return
  }
  func.func @transform_0(%arg0: i32) -> (i32, i32) {
    %c0_i32 = arith.constant 0 : i32
    %c0_i32_0 = arith.constant 0 : i32
    return %arg0, %c0_i32 : i32, i32
  }
  func.func @transform_1(%arg0: i32) -> (i32, i32) {
    %c0_i32 = arith.constant 0 : i32
    %c0_i32_0 = arith.constant 0 : i32
    %c0_i32_1 = arith.constant 0 : i32
    return %c0_i32, %c0_i32_0 : i32, i32
  }
  func.func @transform_2(%arg0: i32) -> (i32, i32) {
    %c0_i32 = arith.constant 0 : i32
    %c0_i32_0 = arith.constant 0 : i32
    %c0_i32_1 = arith.constant 0 : i32
    return %c0_i32, %c0_i32_0 : i32, i32
  }
  func.func @transform_3(%arg0: i32) -> (i32, i32) {
    %c0_i32 = arith.constant 0 : i32
    %c0_i32_0 = arith.constant 0 : i32
    return %arg0, %c0_i32 : i32, i32
  }
  func.func @transform_4(%arg0: i32) -> (i32, i32) {
    %c0_i32 = arith.constant 0 : i32
    %c0_i32_0 = arith.constant 0 : i32
    return %arg0, %c0_i32 : i32, i32
  }
  func.func @transform_5(%arg0: i32) -> (i32, i32) {
    %c0_i32 = arith.constant 0 : i32
    %c0_i32_0 = arith.constant 0 : i32
    return %arg0, %c0_i32 : i32, i32
  }
}

</mosaic_0001>

<llo_original>
// kernel: tpu_custom_call.1
$region0: #{tpu_custom_call.1}
  #allocation0 [shape = 'u32[]', space=smem, size = 0x4, offset = 0x4, fixed_abs, tag = 'smem constant byte address 0x4 - core index']
  #allocation1 [shape = 'u32[72,128]{1,0:T(1,128)}', space=vmem, size = 0x9000, scoped, tag = 'internal scratch']
  %s0 = inlined_call_operand.hbm [shape: bf16[8,32], index: 0, kind: input, shape index: {}]
  %s1 = inlined_call_operand.hbm [shape: bf16[32,64], index: 1, kind: input, shape index: {}]
  %s2 = inlined_call_operand.hbm [shape: f32[3,64], index: 2, kind: input, shape index: {}]
  %s3 = inlined_call_operand.hbm [shape: bf16[8,64], index: 3, kind: input, shape index: {}]
  %s4 = inlined_call_operand.hbm [shape: f32[8,32], index: 4, kind: input, shape index: {}]
  %s5 = inlined_call_operand.hbm [shape: f32[8,64], index: 5, kind: output, shape index: {}]
  %s6 = sld [smem:[#allocation0]]
  $region50: #{tpu_custom_call.1} parent=0
    _
  %s8 = ssub.s32 1, %s6
  %s9 = scalar_select 0, %s8, %s6
  $region1: #{tpu_custom_call.1} parent=0
    #allocation2 [shape = 'u8[2048]{0}', space=vmem, size = 0x800, scoped, tag = 'input window, operand 0, single buffered']
    #allocation3 [shape = 's32[1]{0}', space=sflag, size = 0x4, scoped, tag = 'scoped memory for tpu_custom_call.1']
    #allocation4 [shape = 's32[1]{0}', space=sflag, size = 0x4, scoped, tag = 'scoped memory for tpu_custom_call.1']
    #allocation5 [shape = 'u8[8192]{0}', space=vmem, size = 0x2000, scoped, tag = 'input window, operand 1, single buffered']
    #allocation6 [shape = 's32[1]{0}', space=sflag, size = 0x4, scoped, tag = 'scoped memory for tpu_custom_call.1']
    #allocation7 [shape = 'u8[2048]{0}', space=vmem, size = 0x800, scoped, tag = 'input window, operand 2, single buffered']
    #allocation8 [shape = 'u8[2048]{0}', space=vmem, size = 0x800, scoped, tag = 'input window, operand 3, single buffered']
    #allocation9 [shape = 's32[1]{0}', space=sflag, size = 0x4, scoped, tag = 'scoped memory for tpu_custom_call.1']
    #allocation10 [shape = 'u8[4096]{0}', space=vmem, size = 0x1000, scoped, tag = 'input window, operand 4, single buffered']
    #allocation11 [shape = 'u8[4096]{0}', space=vmem, size = 0x1000, scoped, tag = 'output window, operand 0, single buffered']
    %10 = vsyncpa [#allocation3], 0
    %11 = vsyncpa [#allocation6], 0
    %12 = vsyncpa [#allocation9], 0
    %13 = vsyncpa [#allocation4], 0
    // Predicated region
    $region2: #{tpu_custom_call.1} parent=1 // pred_check
      _
    $region3: #{tpu_custom_call.1} parent=1 // pred_check_branch
      %15 = sbr.rel (0) target = $region5
    $region4: #{tpu_custom_call.1} parent=1 // pred_region
      %17 = vsyncadd [#allocation3], 0
      %s19 = sshll.u32 %s0, 4
      %s20 = int_to_ptr.hbm [resolvable:$true] %s19
      %s21 = sshll.u32 [#allocation2], 4
      %s22 = int_to_ptr.vmem [resolvable:$true] %s21
      %24 = dma.hbm_to_vmem [thread:$0]  %s20, 64, %s22, [#allocation3]
    $region5: #{tpu_custom_call.1} parent=1 // pred_fallthru
      _
    // Predicated region
    $region6: #{tpu_custom_call.1} parent=1 // pred_check
      _
    $region7: #{tpu_custom_call.1} parent=1 // pred_check_branch
      %26 = sbr.rel (0) target = $region9
    $region8: #{tpu_custom_call.1} parent=1 // pred_region
      %28 = vsyncadd [#allocation6], 0
      %s29 = sshll.u32 %s1, 4
      %s30 = int_to_ptr.hbm [resolvable:$true] %s29
      %s31 = sshll.u32 [#allocation5], 4
      %s32 = int_to_ptr.vmem [resolvable:$true] %s31
      %37 = dma.hbm_to_vmem [thread:$0]  %s30, 256, %s32, [#allocation6], 64, 64, 4
    $region9: #{tpu_custom_call.1} parent=1 // pred_fallthru
      _
    // Predicated region
    $region10: #{tpu_custom_call.1} parent=1 // pred_check
      _
    $region11: #{tpu_custom_call.1} parent=1 // pred_check_branch
      %39 = sbr.rel (0) target = $region13
    $region12: #{tpu_custom_call.1} parent=1 // pred_region
      %41 = vsyncadd [#allocation6], 0
      %s43 = sshll.u32 %s2, 4
      %s44 = int_to_ptr.hbm [resolvable:$true] %s43
      %s45 = sshll.u32 [#allocation7], 4
      %s46 = int_to_ptr.vmem [resolvable:$true] %s45
      %48 = dma.hbm_to_vmem [thread:$0]  %s44, 64, %s46, [#allocation6]
    $region13: #{tpu_custom_call.1} parent=1 // pred_fallthru
      _
    // Predicated region
    $region14: #{tpu_custom_call.1} parent=1 // pred_check
      _
    $region15: #{tpu_custom_call.1} parent=1 // pred_check_branch
      %50 = sbr.rel (0) target = $region17
    $region16: #{tpu_custom_call.1} parent=1 // pred_region
      %52 = vsyncadd [#allocation9], 0
      %s54 = sshll.u32 %s3, 4
      %s55 = int_to_ptr.hbm [resolvable:$true] %s54
      %s56 = sshll.u32 [#allocation8], 4
      %s57 = int_to_ptr.vmem [resolvable:$true] %s56
      %59 = dma.hbm_to_vmem [thread:$0]  %s55, 64, %s57, [#allocation9]
    $region17: #{tpu_custom_call.1} parent=1 // pred_fallthru
      _
    // Predicated region
    $region18: #{tpu_custom_call.1} parent=1 // pred_check
      _
    $region19: #{tpu_custom_call.1} parent=1 // pred_check_branch
      %61 = sbr.rel (0) target = $region21
    $region20: #{tpu_custom_call.1} parent=1 // pred_region
      %63 = vsyncadd [#allocation9], 0
      %s65 = sshll.u32 %s4, 4
      %s66 = int_to_ptr.hbm [resolvable:$true] %s65
      %s67 = sshll.u32 [#allocation10], 4
      %s68 = int_to_ptr.vmem [resolvable:$true] %s67
      %70 = dma.hbm_to_vmem [thread:$0]  %s66, 128, %s68, [#allocation9]
    $region21: #{tpu_custom_call.1} parent=1 // pred_fallthru
      _
    // Predicated region
    $region22: #{tpu_custom_call.1} parent=1 // pred_check
      _
    $region23: #{tpu_custom_call.1} parent=1 // pred_check_branch
      %72 = sbr.rel (0) target = $region25
    $region24: #{tpu_custom_call.1} parent=1 // pred_region
      %74 = dma.done [#allocation3], 64
    $region25: #{tpu_custom_call.1} parent=1 // pred_fallthru
      _
    // Predicated region
    $region26: #{tpu_custom_call.1} parent=1 // pred_check
      _
    $region27: #{tpu_custom_call.1} parent=1 // pred_check_branch
      %76 = sbr.rel (0) target = $region29
    $region28: #{tpu_custom_call.1} parent=1 // pred_region
      %78 = dma.done [#allocation6], 256
    $region29: #{tpu_custom_call.1} parent=1 // pred_fallthru
      _
    // Predicated region
    $region30: #{tpu_custom_call.1} parent=1 // pred_check
      _
    $region31: #{tpu_custom_call.1} parent=1 // pred_check_branch
      %80 = sbr.rel (0) target = $region33
    $region32: #{tpu_custom_call.1} parent=1 // pred_region
      %82 = dma.done [#allocation6], 64
    $region33: #{tpu_custom_call.1} parent=1 // pred_fallthru
      _
    // Predicated region
    $region34: #{tpu_custom_call.1} parent=1 // pred_check
      _
    $region35: #{tpu_custom_call.1} parent=1 // pred_check_branch
      %84 = sbr.rel (0) target = $region37
    $region36: #{tpu_custom_call.1} parent=1 // pred_region
      %86 = dma.done [#allocation9], 64
    $region37: #{tpu_custom_call.1} parent=1 // pred_fallthru
      _
    // Predicated region
    $region38: #{tpu_custom_call.1} parent=1 // pred_check
      _
    $region39: #{tpu_custom_call.1} parent=1 // pred_check_branch
      %88 = sbr.rel (0) target = $region41
    $region40: #{tpu_custom_call.1} parent=1 // pred_region
      %90 = dma.done [#allocation9], 128
    $region41: #{tpu_custom_call.1} parent=1 // pred_fallthru
      _
    %v92 = vld [vmem:[#allocation2] sm:$0xf]
    %v93 = vld [vmem:[#allocation5] sm:$0xf]
    %v94 = vld [vmem:[#allocation5 + $0x4] sm:$0xf]
    %v95 = vld [vmem:[#allocation5 + $0x8] sm:$0xf]
    %v96 = vld [vmem:[#allocation5 + $0xc] sm:$0xf]
    %v97 = vld [vmem:[#allocation7] sm:$0x1]
    %v98 = vperm.slane %v97, 0
    %v103 = vunpack.c.l.b16 %v93
    %v104 = vunpack.c.l.b16 %v94
    %v105 = vunpack.c.l.b16 %v95
    %v106 = vunpack.c.l.b16 %v96
    %v107 = vpack.c.b16 %v104, %v103
    %v108 = vpack.c.b16 %v106, %v105
    %vm111 = vcmask 261120
    %v113 = vsel %vm111, %v92, 0
    %115 = vmatpush.bf16.msra.mxu0 0
    %116 = vmatpush.bf16.msra.mxu0 0
    %117 = vmatpush.bf16.msra.mxu0 0
    %118 = vmatpush.bf16.msra.mxu0 0
    %119 = vmatpush.bf16.msra.mxu0 0
    %120 = vmatpush.bf16.msra.mxu0 0
    %121 = vmatpush.bf16.msra.mxu0 %v108
    %122 = vmatpush.bf16.msra.mxu0 %v107
    %123 = vmatmul.bf16.gmra.mxu0 %v113
    %v124 = vpop.f32.mrf.mxu0
    %v125 = vadd.f32 %v98, %v124
    %v126 = vpop.f32.mrf.mxu0
    %127 = vdwg.mxu0
    %vm128 = vcmask 523264
    %v129 = vsel %vm128, %v125, 0.0
    %130 = vadd.xlane.f32.xlu0 %v129
    %v131 = vpop.xlane.xlu0 %130
    %v132 = vrcp.pop 64.0
    %v133 = vmul.f32 64.0, %v132
    %v134 = vsub.f32 1.0, %v133
    %v135 = vmul.f32 %v132, %v134
    %v136 = vadd.f32 %v132, %v135
    %vm137 = vweird.f32 %v132
    %v138 = vsel %vm137, %v132, %v136
    %v139 = vmul.f32 %v131, %v138
    %v140 = vsub.f32 %v125, %v139
    %v141 = vmul.f32 %v140, %v140
    %v142 = vsel %vm128, %v141, 0.0
    %143 = vadd.xlane.f32.xlu0 %v142
    %v144 = vpop.xlane.xlu0 %143
    %v145 = vmul.f32 %v144, %v138
    %v146 = vadd.f32 %v145, 1e-05
    %v147 = vrsqrt.pop %v146
    %v148 = vmul.f32 %v147, %v146
    %v149 = vmul.f32 %v148, %v147
    %v150 = vmul.f32 0.5, %v149
    %v151 = vsub.f32 1.5, %v150
    %v152 = vmul.f32 %v147, %v151
    %vm153 = vweird.f32 %v146
    %vm154 = vweird.f32 %v147
    %vm155 = vmor %vm153, %vm154
    %v156 = vsel %vm155, %v147, %v152
    %v157 = vmul.f32 %v140, %v156
    %v158 = vld [vmem:[#allocation7 + $0x1] sm:$0x1]
    %v159 = vperm.slane %v158, 0
    %v160 = vmul.f32 %v157, %v159
    %v161 = vld [vmem:[#allocation7 + $0x2] sm:$0x1]
    %v162 = vperm.slane %v161, 0
    %v163 = vadd.f32 %v160, %v162
    %v164 = vmax.f32 %v163, 0.0
    %v165 = vld [vmem:[#allocation8] sm:$0xf]
    %v166 = vunpack.c.l.bf16 %v165
    %v167 = vadd.f32 %v164, %v166
    %169 = vrot.lane.b32.xlu0 %v167, 32
    %v170 = vpop.permute.xlu0 %169
    %v172 = vsub.f32 %v167, %v170
    %v173 = vmul.f32 %v172, 1.442695
    %v174 = vpow.pop %v173
    %v175 = vadd.f32 %v174, 1.0
    %v176 = vrcp.pop %v175
    %v177 = vmul.f32 %v175, %v176
    %v178 = vsub.f32 1.0, %v177
    %v179 = vmul.f32 %v176, %v178
    %v180 = vadd.f32 %v176, %v179
    %vm181 = vweird.f32 %v175
    %vm182 = vweird.f32 %v176
    %vm183 = vmor %vm181, %vm182
    %v184 = vsel %vm183, %v176, %v180
    %v185 = vand.u32 2147483647, %v175
    %vm186 = vcmp.eq.f32.partialorder %v185, 8.507059e+37
    %v187 = vand.u32 %v175, 2147483648
    %v188 = vor.u32 1.1754944e-38, %v187
    %v189 = vsel %vm186, %v188, %v184
    %v190 = vmul.f32 1.0, %v189
    %v191 = vld [vmem:[#allocation10] sm:$0xff]
    %193 = vrot.lane.b32.xlu0 %v190, 96
    %v194 = vpop.permute.xlu0 %193
    %v196 = vmul.f32 %v191, %v194
    %197 = vst.msk [vmem:[#allocation11] sm:$0xff] %vm111, %v194
    %199 = vrot.lane.b32.xlu0 %v196, 32
    %v200 = vpop.permute.xlu0 %199
    %vm202 = vcmask 523520
    %203 = vst.msk [vmem:[#allocation11] sm:$0xff] %vm202, %v200
    // Predicated region
    $region42: #{tpu_custom_call.1} parent=1 // pred_check
      _
    $region43: #{tpu_custom_call.1} parent=1 // pred_check_branch
      %205 = sbr.rel (0) target = $region45
    $region44: #{tpu_custom_call.1} parent=1 // pred_region
      %207 = vsyncadd [#allocation4], 0
      %s209 = sshll.u32 [#allocation11], 4
      %s210 = int_to_ptr.vmem [resolvable:$true] %s209
      %s211 = sshll.u32 %s5, 4
      %s212 = int_to_ptr.hbm [resolvable:$true] %s211
      %214 = dma.vmem_to_hbm [thread:$0]  %s210, 128, %s212, [#allocation4]
    $region45: #{tpu_custom_call.1} parent=1 // pred_fallthru
      _
    // Predicated region
    $region46: #{tpu_custom_call.1} parent=1 // pred_check
      _
    $region47: #{tpu_custom_call.1} parent=1 // pred_check_branch
      %216 = sbr.rel (0) target = $region49
    $region48: #{tpu_custom_call.1} parent=1 // pred_region
      %218 = dma.done [#allocation4], 128
    $region49: #{tpu_custom_call.1} parent=1 // pred_fallthru
      _
    %219 = vsyncpa [#allocation3], 1
    %220 = vsyncpa [#allocation6], 1
    %221 = vsyncpa [#allocation9], 1
    %222 = vsyncpa [#allocation4], 1

// kernel: tpu_custom_call.1
$region0: #{tpu_custom_call.1}
  #allocation0 [shape = 'u32[]', space=smem, size = 0x4, offset = 0x4, fixed_abs, tag = 'smem constant byte address 0x4 - core index']
  #allocation1 [shape = 'u32[72,128]{1,0:T(1,128)}', space=vmem, size = 0x9000, scoped, tag = 'internal scratch']
  %s0 = inlined_call_operand.hbm [shape: bf16[8,32], index: 0, kind: input, shape index: {}]
  %s1 = inlined_call_operand.hbm [shape: bf16[32,64], index: 1, kind: input, shape index: {}]
  %s2 = inlined_call_operand.hbm [shape: f32[3,64], index: 2, kind: input, shape index: {}]
  %s3 = inlined_call_operand.hbm [shape: bf16[8,64], index: 3, kind: input, shape index: {}]
  %s4 = inlined_call_operand.hbm [shape: f32[8,32], index: 4, kind: input, shape index: {}]
  %s5 = inlined_call_operand.hbm [shape: f32[8,64], index: 5, kind: output, shape index: {}]
  %s6 = sld [smem:[#allocation0]]
  $region50: #{tpu_custom_call.1} parent=0
    _
  %s8 = ssub.s32 1, %s6
  %s9 = scalar_select 0, %s8, %s6
  $region1: #{tpu_custom_call.1} parent=0
    #allocation2 [shape = 'u8[2048]{0}', space=vmem, size = 0x800, scoped, tag = 'input window, operand 0, single buffered']
    #allocation3 [shape = 's32[1]{0}', space=sflag, size = 0x4, scoped, tag = 'scoped memory for tpu_custom_call.1']
    #allocation4 [shape = 's32[1]{0}', space=sflag, size = 0x4, scoped, tag = 'scoped memory for tpu_custom_call.1']
    #allocation5 [shape = 'u8[8192]{0}', space=vmem, size = 0x2000, scoped, tag = 'input window, operand 1, single buffered']
    #allocation6 [shape = 's32[1]{0}', space=sflag, size = 0x4, scoped, tag = 'scoped memory for tpu_custom_call.1']
    #allocation7 [shape = 'u8[2048]{0}', space=vmem, size = 0x800, scoped, tag = 'input window, operand 2, single buffered']
    #allocation8 [shape = 'u8[2048]{0}', space=vmem, size = 0x800, scoped, tag = 'input window, operand 3, single buffered']
    #allocation9 [shape = 's32[1]{0}', space=sflag, size = 0x4, scoped, tag = 'scoped memory for tpu_custom_call.1']
    #allocation10 [shape = 'u8[4096]{0}', space=vmem, size = 0x1000, scoped, tag = 'input window, operand 4, single buffered']
    #allocation11 [shape = 'u8[4096]{0}', space=vmem, size = 0x1000, scoped, tag = 'output window, operand 0, single buffered']
    %10 = vsyncpa [#allocation3], 0
    %11 = vsyncpa [#allocation6], 0
    %12 = vsyncpa [#allocation9], 0
    %13 = vsyncpa [#allocation4], 0
    // Predicated region
    $region2: #{tpu_custom_call.1} parent=1 // pred_check
      _
    $region3: #{tpu_custom_call.1} parent=1 // pred_check_branch
      %15 = sbr.rel (0) target = $region5
    $region4: #{tpu_custom_call.1} parent=1 // pred_region
      %17 = vsyncadd [#allocation3], 0
      %s19 = sshll.u32 %s0, 4
      %s20 = int_to_ptr.hbm [resolvable:$true] %s19
      %s21 = sshll.u32 [#allocation2], 4
      %s22 = int_to_ptr.vmem [resolvable:$true] %s21
      %24 = dma.hbm_to_vmem [thread:$0]  %s20, 64, %s22, [#allocation3]
    $region5: #{tpu_custom_call.1} parent=1 // pred_fallthru
      _
    // Predicated region
    $region6: #{tpu_custom_call.1} parent=1 // pred_check
      _
    $region7: #{tpu_custom_call.1} parent=1 // pred_check_branch
      %26 = sbr.rel (0) target = $region9
    $region8: #{tpu_custom_call.1} parent=1 // pred_region
      %28 = vsyncadd [#allocation6], 0
      %s29 = sshll.u32 %s1, 4
      %s30 = int_to_ptr.hbm [resolvable:$true] %s29
      %s31 = sshll.u32 [#allocation5], 4
      %s32 = int_to_ptr.vmem [resolvable:$true] %s31
      %37 = dma.hbm_to_vmem [thread:$0]  %s30, 256, %s32, [#allocation6], 64, 64, 4
    $region9: #{tpu_custom_call.1} parent=1 // pred_fallthru
      _
    // Predicated region
    $region10: #{tpu_custom_call.1} parent=1 // pred_check
      _
    $region11: #{tpu_custom_call.1} parent=1 // pred_check_branch
      %39 = sbr.rel (0) target = $region13
    $region12: #{tpu_custom_call.1} parent=1 // pred_region
      %41 = vsyncadd [#allocation6], 0
      %s43 = sshll.u32 %s2, 4
      %s44 = int_to_ptr.hbm [resolvable:$true] %s43
      %s45 = sshll.u32 [#allocation7], 4
      %s46 = int_to_ptr.vmem [resolvable:$true] %s45
      %48 = dma.hbm_to_vmem [thread:$0]  %s44, 64, %s46, [#allocation6]
    $region13: #{tpu_custom_call.1} parent=1 // pred_fallthru
      _
    // Predicated region
    $region14: #{tpu_custom_call.1} parent=1 // pred_check
      _
    $region15: #{tpu_custom_call.1} parent=1 // pred_check_branch
      %50 = sbr.rel (0) target = $region17
    $region16: #{tpu_custom_call.1} parent=1 // pred_region
      %52 = vsyncadd [#allocation9], 0
      %s54 = sshll.u32 %s3, 4
      %s55 = int_to_ptr.hbm [resolvable:$true] %s54
      %s56 = sshll.u32 [#allocation8], 4
      %s57 = int_to_ptr.vmem [resolvable:$true] %s56
      %59 = dma.hbm_to_vmem [thread:$0]  %s55, 64, %s57, [#allocation9]
    $region17: #{tpu_custom_call.1} parent=1 // pred_fallthru
      _
    // Predicated region
    $region18: #{tpu_custom_call.1} parent=1 // pred_check
      _
    $region19: #{tpu_custom_call.1} parent=1 // pred_check_branch
      %61 = sbr.rel (0) target = $region21
    $region20: #{tpu_custom_call.1} parent=1 // pred_region
      %63 = vsyncadd [#allocation9], 0
      %s65 = sshll.u32 %s4, 4
      %s66 = int_to_ptr.hbm [resolvable:$true] %s65
      %s67 = sshll.u32 [#allocation10], 4
      %s68 = int_to_ptr.vmem [resolvable:$true] %s67
      %70 = dma.hbm_to_vmem [thread:$0]  %s66, 128, %s68, [#allocation9]
    $region21: #{tpu_custom_call.1} parent=1 // pred_fallthru
      _
    // Predicated region
    $region22: #{tpu_custom_call.1} parent=1 // pred_check
      _
    $region23: #{tpu_custom_call.1} parent=1 // pred_check_branch
      %72 = sbr.rel (0) target = $region25
    $region24: #{tpu_custom_call.1} parent=1 // pred_region
      %74 = dma.done [#allocation3], 64
    $region25: #{tpu_custom_call.1} parent=1 // pred_fallthru
      _
    // Predicated region
    $region26: #{tpu_custom_call.1} parent=1 // pred_check
      _
    $region27: #{tpu_custom_call.1} parent=1 // pred_check_branch
      %76 = sbr.rel (0) target = $region29
    $region28: #{tpu_custom_call.1} parent=1 // pred_region
      %78 = dma.done [#allocation6], 256
    $region29: #{tpu_custom_call.1} parent=1 // pred_fallthru
      _
    // Predicated region
    $region30: #{tpu_custom_call.1} parent=1 // pred_check
      _
    $region31: #{tpu_custom_call.1} parent=1 // pred_check_branch
      %80 = sbr.rel (0) target = $region33
    $region32: #{tpu_custom_call.1} parent=1 // pred_region
      %82 = dma.done [#allocation6], 64
    $region33: #{tpu_custom_call.1} parent=1 // pred_fallthru
      _
    // Predicated region
    $region34: #{tpu_custom_call.1} parent=1 // pred_check
      _
    $region35: #{tpu_custom_call.1} parent=1 // pred_check_branch
      %84 = sbr.rel (0) target = $region37
    $region36: #{tpu_custom_call.1} parent=1 // pred_region
      %86 = dma.done [#allocation9], 64
    $region37: #{tpu_custom_call.1} parent=1 // pred_fallthru
      _
    // Predicated region
    $region38: #{tpu_custom_call.1} parent=1 // pred_check
      _
    $region39: #{tpu_custom_call.1} parent=1 // pred_check_branch
      %88 = sbr.rel (0) target = $region41
    $region40: #{tpu_custom_call.1} parent=1 // pred_region
      %90 = dma.done [#allocation9], 128
    $region41: #{tpu_custom_call.1} parent=1 // pred_fallthru
      _
    %v92 = vld [vmem:[#allocation2] sm:$0xf]
    %v93 = vld [vmem:[#allocation5] sm:$0xf]
    %v94 = vld [vmem:[#allocation5 + $0x4] sm:$0xf]
    %v95 = vld [vmem:[#allocation5 + $0x8] sm:$0xf]
    %v96 = vld [vmem:[#allocation5 + $0xc] sm:$0xf]
    %v97 = vld [vmem:[#allocation7] sm:$0x1]
    %v98 = vperm.slane %v97, 0
    %v103 = vunpack.c.l.b16 %v93
    %v104 = vunpack.c.l.b16 %v94
    %v105 = vunpack.c.l.b16 %v95
    %v106 = vunpack.c.l.b16 %v96
    %v107 = vpack.c.b16 %v104, %v103
    %v108 = vpack.c.b16 %v106, %v105
    %vm111 = vcmask 261120
    %v113 = vsel %vm111, %v92, 0
    %115 = vmatpush.bf16.msra.mxu0 0
    %116 = vmatpush.bf16.msra.mxu0 0
    %117 = vmatpush.bf16.msra.mxu0 0
    %118 = vmatpush.bf16.msra.mxu0 0
    %119 = vmatpush.bf16.msra.mxu0 0
    %120 = vmatpush.bf16.msra.mxu0 0
    %121 = vmatpush.bf16.msra.mxu0 %v108
    %122 = vmatpush.bf16.msra.mxu0 %v107
    %123 = vmatmul.bf16.gmra.mxu0 %v113
    %v124 = vpop.f32.mrf.mxu0
    %v125 = vadd.f32 %v98, %v124
    %v126 = vpop.f32.mrf.mxu0
    %127 = vdwg.mxu0
    %vm128 = vcmask 523264
    %v129 = vsel %vm128, %v125, 0.0
    %130 = vadd.xlane.f32.xlu0 %v129
    %v131 = vpop.xlane.xlu0 %130
    %v132 = vrcp.pop 64.0
    %v133 = vmul.f32 64.0, %v132
    %v134 = vsub.f32 1.0, %v133
    %v135 = vmul.f32 %v132, %v134
    %v136 = vadd.f32 %v132, %v135
    %vm137 = vweird.f32 %v132
    %v138 = vsel %vm137, %v132, %v136
    %v139 = vmul.f32 %v131, %v138
    %v140 = vsub.f32 %v125, %v139
    %v141 = vmul.f32 %v140, %v140
    %v142 = vsel %vm128, %v141, 0.0
    %143 = vadd.xlane.f32.xlu0 %v142
    %v144 = vpop.xlane.xlu0 %143
    %v145 = vmul.f32 %v144, %v138
    %v146 = vadd.f32 %v145, 1e-05
    %v147 = vrsqrt.pop %v146
    %v148 = vmul.f32 %v147, %v146
    %v149 = vmul.f32 %v148, %v147
    %v150 = vmul.f32 0.5, %v149
    %v151 = vsub.f32 1.5, %v150
    %v152 = vmul.f32 %v147, %v151
    %vm153 = vweird.f32 %v146
    %vm154 = vweird.f32 %v147
    %vm155 = vmor %vm153, %vm154
    %v156 = vsel %vm155, %v147, %v152
    %v157 = vmul.f32 %v140, %v156
    %v158 = vld [vmem:[#allocation7 + $0x1] sm:$0x1]
    %v159 = vperm.slane %v158, 0
    %v160 = vmul.f32 %v157, %v159
    %v161 = vld [vmem:[#allocation7 + $0x2] sm:$0x1]
    %v162 = vperm.slane %v161, 0
    %v163 = vadd.f32 %v160, %v162
    %v164 = vmax.f32 %v163, 0.0
    %v165 = vld [vmem:[#allocation8] sm:$0xf]
    %v166 = vunpack.c.l.bf16 %v165
    %v167 = vadd.f32 %v164, %v166
    %169 = vrot.lane.b32.xlu0 %v167, 32
    %v170 = vpop.permute.xlu0 %169
    %v172 = vsub.f32 %v167, %v170
    %v173 = vmul.f32 %v172, 1.442695
    %v174 = vpow.pop %v173
    %v175 = vadd.f32 %v174, 1.0
    %v176 = vrcp.pop %v175
    %v177 = vmul.f32 %v175, %v176
    %v178 = vsub.f32 1.0, %v177
    %v179 = vmul.f32 %v176, %v178
    %v180 = vadd.f32 %v176, %v179
    %vm181 = vweird.f32 %v175
    %vm182 = vweird.f32 %v176
    %vm183 = vmor %vm181, %vm182
    %v184 = vsel %vm183, %v176, %v180
    %v185 = vand.u32 2147483647, %v175
    %vm186 = vcmp.eq.f32.partialorder %v185, 8.507059e+37
    %v187 = vand.u32 %v175, 2147483648
    %v188 = vor.u32 1.1754944e-38, %v187
    %v189 = vsel %vm186, %v188, %v184
    %v190 = vmul.f32 1.0, %v189
    %v191 = vld [vmem:[#allocation10] sm:$0xff]
    %193 = vrot.lane.b32.xlu0 %v190, 96
    %v194 = vpop.permute.xlu0 %193
    %v196 = vmul.f32 %v191, %v194
    %197 = vst.msk [vmem:[#allocation11] sm:$0xff] %vm111, %v194
    %199 = vrot.lane.b32.xlu0 %v196, 32
    %v200 = vpop.permute.xlu0 %199
    %vm202 = vcmask 523520
    %203 = vst.msk [vmem:[#allocation11] sm:$0xff] %vm202, %v200
    // Predicated region
    $region42: #{tpu_custom_call.1} parent=1 // pred_check
      _
    $region43: #{tpu_custom_call.1} parent=1 // pred_check_branch
      %205 = sbr.rel (0) target = $region45
    $region44: #{tpu_custom_call.1} parent=1 // pred_region
      %207 = vsyncadd [#allocation4], 0
      %s209 = sshll.u32 [#allocation11], 4
      %s210 = int_to_ptr.vmem [resolvable:$true] %s209
      %s211 = sshll.u32 %s5, 4
      %s212 = int_to_ptr.hbm [resolvable:$true] %s211
      %214 = dma.vmem_to_hbm [thread:$0]  %s210, 128, %s212, [#allocation4]
    $region45: #{tpu_custom_call.1} parent=1 // pred_fallthru
      _
    // Predicated region
    $region46: #{tpu_custom_call.1} parent=1 // pred_check
      _
    $region47: #{tpu_custom_call.1} parent=1 // pred_check_branch
      %216 = sbr.rel (0) target = $region49
    $region48: #{tpu_custom_call.1} parent=1 // pred_region
      %218 = dma.done [#allocation4], 128
    $region49: #{tpu_custom_call.1} parent=1 // pred_fallthru
      _
    %219 = vsyncpa [#allocation3], 1
    %220 = vsyncpa [#allocation6], 1
    %221 = vsyncpa [#allocation9], 1
    %222 = vsyncpa [#allocation4], 1

</llo_original>
